<compile_context>
chip_gen: v5e
topology: v5e:2x2
jax: 0.10.0
libtpu: 0.0.40
codegen_flags: <defaults>
</compile_context>

<pallas_src>
import functools
import math

import jax
import jax.numpy as jnp
from jax.experimental import pallas as pl
from jax.experimental.pallas import tpu as pltpu

_LANE = 128
_SUBLANE = 8


def _round_up(x, m):
    return (x + m - 1) // m * m


# --------------------------------------------------------------------------------------
# Main path: fused in-kernel gather (one-hot built in-kernel, contracted on the MXU).
# --------------------------------------------------------------------------------------
def _gather_mul_kernel(idx_ref, pos_ref, te_ref, tw_ref, o_ref, *, off, width):
    # idx_ref/pos_ref: (tok_tile, 1) int32 ; te_ref/tw_ref: (width, node_dim) f32 resident
    tok = idx_ref.shape[0]
    lane = jax.lax.broadcasted_iota(jnp.int32, (tok, width), dimension=1)
    # Combined one-hot: a 1 at column idx (embedding + folded-linear row) and a 1 at
    # column off+pos (folded one_hot_pos row).  Exactly reproduces
    #   embed = E[idx] ;  w = T1[idx] + T2[pos]
    hit = (lane == idx_ref[...]) | (lane == (pos_ref[...] + off))
    onehot = jnp.where(hit, jnp.float32(1.0), jnp.float32(0.0))
    embed = jnp.dot(onehot, te_ref[...], preferred_element_type=jnp.float32)
    w = jnp.dot(onehot, tw_ref[...], preferred_element_type=jnp.float32)
    o_ref[...] = embed * w


def _forward_fused_gather(idx_flat, pos_flat, emb_table, t1, t2, node_dim,
                          vocab, off, p1, width, tokens_per_tile):
    n_tok = idx_flat.shape[0]
    tok_tile = max(_SUBLANE, min(_round_up(tokens_per_tile, _SUBLANE),
                                 _round_up(max(n_tok, 1), _SUBLANE)))
    n_pad = _round_up(max(n_tok, 1), tok_tile)
    pad = n_pad - n_tok

    zero_pos = p1 - 1                    # last one_hot_pos row is all-zero -> t2 row == 0
    idx_p = jnp.pad(idx_flat, (0, pad)).reshape(n_pad, 1)
    if pos_flat is None:
        pos_p = jnp.full((n_pad, 1), zero_pos, jnp.int32)
    else:
        pos_p = jnp.pad(pos_flat, (0, pad),
                        constant_values=zero_pos).reshape(n_pad, 1)

    # VMEM-resident lookup tables (a few KB each).
    table_e = jnp.zeros((width, node_dim), jnp.float32).at[:vocab].set(emb_table)
    table_w = (jnp.zeros((width, node_dim), jnp.float32)
               .at[:t1.shape[0]].set(t1)
               .at[off:off + p1].set(t2))

    grid = (n_pad // tok_tile,)
    tile_map = lambda i: (i, 0)
    full_map = lambda i: (0, 0)          # same block every step -> DMA'd once, stays resident

    cost = pl.CostEstimate(
        flops=n_pad * (4 * width * node_dim + node_dim),
        transcendentals=0,
        bytes_accessed=n_pad * (2 * 4 + node_dim * 4) + 2 * width * node_dim * 4,
    )

    out_pad = pl.pallas_call(
        functools.partial(_gather_mul_kernel, off=off, width=width),
        out_shape=jax.ShapeDtypeStruct((n_pad, node_dim), jnp.float32),
        grid=grid,
        in_specs=[pl.BlockSpec((tok_tile, 1), tile_map),
                  pl.BlockSpec((tok_tile, 1), tile_map),
                  pl.BlockSpec((width, node_dim), full_map),
                  pl.BlockSpec((width, node_dim), full_map)],
        out_specs=pl.BlockSpec((tok_tile, node_dim), tile_map),
        compiler_params=pltpu.CompilerParams(
            dimension_semantics=("parallel",),   # megacore sharding on v7x
            vmem_limit_bytes=32 * 1024 * 1024,   # safe on v7x's 64 MiB physical VMEM
        ),
        cost_estimate=cost,
    )(idx_p, pos_p, table_e, table_w)
    return out_pad[:n_tok]


# --------------------------------------------------------------------------------------
# Fallback path (very large vocab): XLA gathers with pre-added w, lane-dense slab mul.
# --------------------------------------------------------------------------------------
def _mul_kernel(e_ref, w_ref, o_ref):
    o_ref[...] = e_ref[...] * w_ref[...]


def _forward_xla_gather(idx_flat, pos_flat, emb_table, t1, t2, node_dim,
                        tokens_per_tile):
    n_tok = idx_flat.shape[0]
    # smallest token count whose flattened length is a whole number of (8,128) tiles
    quantum = (_LANE * _SUBLANE) // math.gcd(_LANE * _SUBLANE, node_dim)
    tok_tile = max(quantum, min(_round_up(tokens_per_tile, quantum),
                                _round_up(max(n_tok, 1), quantum)))
    n_pad = _round_up(max(n_tok, 1), tok_tile)
    pad = n_pad - n_tok

    idx_p = jnp.pad(idx_flat, (0, pad))
    # Review item #1: pre-add the two folded-linear gathers in XLA (fused into one pass),
    # so the kernel only streams two operands.
    w = t1[idx_p]
    if pos_flat is not None:
        pos_p = jnp.pad(pos_flat, (0, pad))
        w = w + t2[pos_p]
    embed = emb_table[idx_p]

    rows = n_pad * node_dim // _LANE
    row_tile = tok_tile * node_dim // _LANE            # multiple of 8 by construction
    block = pl.BlockSpec((row_tile, _LANE), lambda i: (i, 0))

    out_rows = pl.pallas_call(
        _mul_kernel,
        out_shape=jax.ShapeDtypeStruct((rows, _LANE), jnp.float32),
        grid=(rows // row_tile,),
        in_specs=[block, block],
        out_specs=block,
        compiler_params=pltpu.CompilerParams(
            dimension_semantics=("parallel",),
            vmem_limit_bytes=32 * 1024 * 1024),
        cost_estimate=pl.CostEstimate(flops=rows * _LANE, transcendentals=0,
                                      bytes_accessed=3 * rows * _LANE * 4),
    )(embed.reshape(rows, _LANE), w.reshape(rows, _LANE))
    return out_rows.reshape(n_pad, node_dim)[:n_tok]


# --------------------------------------------------------------------------------------
# Public wrapper
# --------------------------------------------------------------------------------------
def frag_embeddings_forward(idx, root_bond_pos, params, *, tokens_per_tile=2048,
                            max_onehot_width=1024):
    """JAX wrapper reproducing FragEmbeddings.forward(idx, root_bond_pos)."""
    bond_pos_tensors = params["bond_pos_tensors"].astype(jnp.float32)  # (vocab+1, maxb)
    one_hot_pos      = params["one_hot_pos"].astype(jnp.float32)       # (maxb+1, maxb)
    emb_table        = params["embedding"].astype(jnp.float32)         # (vocab, node_dim)
    w_root           = params["root_w"].astype(jnp.float32)            # (node_dim, maxb)
    b_root           = params["root_b"].astype(jnp.float32)            # (node_dim,)

    node_dim = emb_table.shape[1]
    vocab = emb_table.shape[0]
    v1 = bond_pos_tensors.shape[0]        # vocab + 1
    p1 = one_hot_pos.shape[0]             # max_bond_cnt + 1

    # ---- Fold the Linear into the lookup tables (tiny matmuls, done once per call) ----
    hi = jax.lax.Precision.HIGHEST
    t1 = jnp.dot(bond_pos_tensors, w_root.T, precision=hi) + b_root[None, :]
    t2 = jnp.dot(one_hot_pos, w_root.T, precision=hi)

    orig_shape = idx.shape
    idx_flat = idx.reshape(-1).astype(jnp.int32)
    pos_flat = (None if root_bond_pos is None
                else root_bond_pos.reshape(-1).astype(jnp.int32))

    off = v1                              # pos one-hot columns start after the idx columns
    width = _round_up(off + p1, _LANE)    # combined one-hot width, lane-aligned

    if width <= max_onehot_width:
        out = _forward_fused_gather(idx_flat, pos_flat, emb_table, t1, t2,
                                    node_dim, vocab, off, p1, width, tokens_per_tile)
    else:
        # Huge vocab: in-kernel one-hot would dominate VPU work; fall back to XLA gathers.
        out = _forward_xla_gather(idx_flat, pos_flat, emb_table, t1, t2,
                                  node_dim, tokens_per_tile)
    return out.reshape(*orig_shape, node_dim)


# --------------------------------------------------------------------------------------
# Params + reference
# --------------------------------------------------------------------------------------
def init_params(key, node_dim, edge_dim, vocab_size, max_bond_cnt):
    """Deterministic, in-script parameter init (shapes mirror FragEmbeddings.__init__)."""
    k_emb, k_bp, k_rw, k_rb, k_jw, k_jb = jax.random.split(key, 6)

    bond_pos_tensors = (jax.random.uniform(k_bp, (vocab_size + 1, max_bond_cnt))
                        > 0.5).astype(jnp.float32)

    one_hot_pos = jnp.concatenate(
        [jnp.eye(max_bond_cnt, dtype=jnp.float32),
         jnp.zeros((1, max_bond_cnt), dtype=jnp.float32)], axis=0)

    embedding = jax.random.normal(k_emb, (vocab_size, node_dim), jnp.float32)

    bound_r = 1.0 / jnp.sqrt(jnp.float32(max_bond_cnt))
    root_w = jax.random.uniform(k_rw, (node_dim, max_bond_cnt), jnp.float32,
                                -bound_r, bound_r)
    root_b = jax.random.uniform(k_rb, (node_dim,), jnp.float32, -bound_r, bound_r)

    bound_j = 1.0 / jnp.sqrt(jnp.float32(node_dim))
    joint_w = jax.random.uniform(k_jw, (edge_dim, node_dim), jnp.float32,
                                 -bound_j, bound_j)
    joint_b = jax.random.uniform(k_jb, (edge_dim,), jnp.float32, -bound_j, bound_j)

    return {
        "bond_pos_tensors": bond_pos_tensors,
        "one_hot_pos": one_hot_pos,
        "embedding": embedding,
        "root_w": root_w,
        "root_b": root_b,
        "joint_w": joint_w,   # TODO(synk): joint_embed path not exercised by forward()
        "joint_b": joint_b,
    }


def _reference_forward(idx, root_bond_pos, params):
    one_hot = params["bond_pos_tensors"][idx]
    if root_bond_pos is not None:
        one_hot = one_hot + params["one_hot_pos"][root_bond_pos]
    w = jnp.einsum("...k,dk->...d", one_hot, params["root_w"],
                   precision=jax.lax.Precision.HIGHEST) + params["root_b"]
    embed = params["embedding"][idx]
    return embed * w


if __name__ == "__main__":
    # Small shapes: batch=2, seq=8, node_dim=32, edge_dim=16,
    # vocab_size=20, max_bond_cnt=16.
    node_dim, edge_dim = 32, 16
    vocab_size, max_bond_cnt = 20, 16
    B, S = 2, 8

    key = jax.random.PRNGKey(0)
    k_params, k_idx, k_pos = jax.random.split(key, 3)

    params = init_params(k_params, node_dim, edge_dim, vocab_size, max_bond_cnt)

    idx = jax.random.randint(k_idx, (B, S), 0, vocab_size, dtype=jnp.int32)
    # root_bond_pos in [0, max_bond_cnt]; value == max_bond_cnt selects the zero row
    root_bond_pos = jax.random.randint(k_pos, (B, S), 0, max_bond_cnt + 1,
                                       dtype=jnp.int32)

    out = jax.block_until_ready(frag_embeddings_forward(idx, root_bond_pos, params))
    ref = _reference_forward(idx, root_bond_pos, params)
    assert out.shape == (B, S, node_dim)
    assert jnp.allclose(out, ref, atol=1e-5, rtol=1e-5), "mismatch vs reference"

    # Also exercise the root_bond_pos=None branch of forward().
    out_none = jax.block_until_ready(frag_embeddings_forward(idx, None, params))
    ref_none = _reference_forward(idx, None, params)
    assert jnp.allclose(out_none, ref_none, atol=1e-5, rtol=1e-5), "mismatch (pos=None)"

    print("KERNEL_OK")
</pallas_src>

<mosaic_0001>
module attributes {stable_mosaic.version = 11 : i64} {
  func.func @_gather_mul_kernel(%arg0: i32, %arg1: memref<16x1xi32, #tpu.memory_space<vmem>>, %arg2: memref<16x1xi32, #tpu.memory_space<vmem>>, %arg3: memref<128x32xf32, #tpu.memory_space<vmem>>, %arg4: memref<128x32xf32, #tpu.memory_space<vmem>>, %arg5: memref<16x32xf32, #tpu.memory_space<vmem>>) attributes {dimension_semantics = [#tpu.dimension_semantics<parallel>], iteration_bounds = array<i64: 1>, scalar_prefetch = 0 : i64, scratch_operands = 0 : i64, tpu.core_type = #tpu.core_type<tc>, window_params = [{transform_indices = @transform_0, window_bounds = array<i64: 16, 1>}, {transform_indices = @transform_1, window_bounds = array<i64: 16, 1>}, {pipeline_mode = #tpu.pipeline_mode<synchronous>, transform_indices = @transform_2, window_bounds = array<i64: 128, 32>}, {pipeline_mode = #tpu.pipeline_mode<synchronous>, transform_indices = @transform_3, window_bounds = array<i64: 128, 32>}, {transform_indices = @transform_4, window_bounds = array<i64: 16, 32>}]} {
    %0 = tpu.iota {dimensions = array<i32: 1>} : vector<16x128xi32>
    %c0 = arith.constant 0 : index
    %c0_0 = arith.constant 0 : index
    %1 = vector.load %arg1[%c0, %c0_0] : memref<16x1xi32, #tpu.memory_space<vmem>>, vector<16x1xi32>
    %2 = vector.broadcast %1 : vector<16x1xi32> to vector<16x128xi32>
    %3 = arith.cmpi eq, %0, %2 : vector<16x128xi32>
    %c0_1 = arith.constant 0 : index
    %c0_2 = arith.constant 0 : index
    %4 = vector.load %arg2[%c0_1, %c0_2] : memref<16x1xi32, #tpu.memory_space<vmem>>, vector<16x1xi32>
    %c21_i32 = arith.constant 21 : i32
    %5 = vector.broadcast %c21_i32 : i32 to vector<16x1xi32>
    %6 = arith.addi %4, %5 : vector<16x1xi32>
    %7 = vector.broadcast %6 : vector<16x1xi32> to vector<16x128xi32>
    %8 = arith.cmpi eq, %0, %7 : vector<16x128xi32>
    %9 = arith.ori %3, %8 : vector<16x128xi1>
    %cst = arith.constant 1.000000e+00 : f32
    %cst_3 = arith.constant 0.000000e+00 : f32
    %10 = vector.broadcast %cst : f32 to vector<16x128xf32>
    %11 = vector.broadcast %cst_3 : f32 to vector<16x128xf32>
    %12 = arith.select %9, %10, %11 : vector<16x128xi1>, vector<16x128xf32>
    %c0_4 = arith.constant 0 : index
    %c0_5 = arith.constant 0 : index
    %13 = vector.load %arg3[%c0_4, %c0_5] : memref<128x32xf32, #tpu.memory_space<vmem>>, vector<128x32xf32>
    %cst_6 = arith.constant dense<0.000000e+00> : vector<16x32xf32>
    %14 = tpu.matmul %12, %13, %cst_6 {dimension_numbers = #tpu.dot_dimension_numbers<[1], [0], [0], [1], [0, 0, 1, 1], [], []>} : vector<16x128xf32>, vector<128x32xf32>, vector<16x32xf32> -> vector<16x32xf32>
    %c0_7 = arith.constant 0 : index
    %c0_8 = arith.constant 0 : index
    %15 = vector.load %arg4[%c0_7, %c0_8] : memref<128x32xf32, #tpu.memory_space<vmem>>, vector<128x32xf32>
    %cst_9 = arith.constant dense<0.000000e+00> : vector<16x32xf32>
    %16 = tpu.matmul %12, %15, %cst_9 {dimension_numbers = #tpu.dot_dimension_numbers<[1], [0], [0], [1], [0, 0, 1, 1], [], []>} : vector<16x128xf32>, vector<128x32xf32>, vector<16x32xf32> -> vector<16x32xf32>
    %17 = arith.mulf %14, %16 : vector<16x32xf32>
    %c0_10 = arith.constant 0 : index
    %c0_11 = arith.constant 0 : index
    %18 = vector.load %arg5[%c0_10, %c0_11] : memref<16x32xf32, #tpu.memory_space<vmem>>, vector<16x32xf32>
    tpu.vector_store %arg5[%c0_10, %c0_11], %17 {strides = array<i32>} : memref<16x32xf32, #tpu.memory_space<vmem>>, vector<16x32xf32>,
    return
  }
  func.func @transform_0(%arg0: i32) -> (i32, i32) {
    %c0_i32 = arith.constant 0 : i32
    %c0_i32_0 = arith.constant 0 : i32
    return %arg0, %c0_i32 : i32, i32
  }
  func.func @transform_1(%arg0: i32) -> (i32, i32) {
    %c0_i32 = arith.constant 0 : i32
    %c0_i32_0 = arith.constant 0 : i32
    return %arg0, %c0_i32 : i32, i32
  }
  func.func @transform_2(%arg0: i32) -> (i32, i32) {
    %c0_i32 = arith.constant 0 : i32
    %c0_i32_0 = arith.constant 0 : i32
    %c0_i32_1 = arith.constant 0 : i32
    return %c0_i32, %c0_i32_0 : i32, i32
  }
  func.func @transform_3(%arg0: i32) -> (i32, i32) {
    %c0_i32 = arith.constant 0 : i32
    %c0_i32_0 = arith.constant 0 : i32
    %c0_i32_1 = arith.constant 0 : i32
    return %c0_i32, %c0_i32_0 : i32, i32
  }
  func.func @transform_4(%arg0: i32) -> (i32, i32) {
    %c0_i32 = arith.constant 0 : i32
    %c0_i32_0 = arith.constant 0 : i32
    return %arg0, %c0_i32 : i32, i32
  }
}

</mosaic_0001>

<llo_original>
// kernel: tpu_custom_call.1
$region0: #{tpu_custom_call.1}
  #allocation0 [shape = 'u32[]', space=smem, size = 0x4, offset = 0x4, fixed_abs, tag = 'smem constant byte address 0x4 - core index']
  #allocation1 [shape = 'u32[72,128]{1,0:T(1,128)}', space=vmem, size = 0x9000, scoped, tag = 'internal scratch']
  %s0 = inlined_call_operand.vmem [shape: s32[16,1], index: 0, kind: input, shape index: {}]
  %s1 = inlined_call_operand.vmem [shape: s32[16,1], index: 1, kind: input, shape index: {}]
  %s2 = inlined_call_operand.vmem [shape: f32[128,32], index: 2, kind: input, shape index: {}]
  %s3 = inlined_call_operand.vmem [shape: f32[128,32], index: 3, kind: input, shape index: {}]
  %s4 = inlined_call_operand.hbm [shape: f32[16,32], index: 4, kind: output, shape index: {}]
  %s5 = sld [smem:[#allocation0]]
  $region26: #{tpu_custom_call.1} parent=0
    _
  %s7 = ssub.s32 1, %s5
  %s8 = scalar_select 0, %s7, %s5
  $region1: #{tpu_custom_call.1} parent=0
    #allocation2 [shape = 'u8[8192]{0}', space=vmem, size = 0x2000, scoped, tag = 'output window, operand 0, single buffered']
    #allocation3 [shape = 's32[1]{0}', space=sflag, size = 0x4, scoped, tag = 'scoped memory for tpu_custom_call.1']
    %9 = vsyncpa [#allocation3], 0
    // Predicated region
    $region2: #{tpu_custom_call.1} parent=1 // pred_check
      _
    $region3: #{tpu_custom_call.1} parent=1 // pred_check_branch
      %11 = sbr.rel (0) target = $region5
    $region4: #{tpu_custom_call.1} parent=1 // pred_region
      _
    $region5: #{tpu_custom_call.1} parent=1 // pred_fallthru
      _
    // Predicated region
    $region6: #{tpu_custom_call.1} parent=1 // pred_check
      _
    $region7: #{tpu_custom_call.1} parent=1 // pred_check_branch
      %13 = sbr.rel (0) target = $region9
    $region8: #{tpu_custom_call.1} parent=1 // pred_region
      _
    $region9: #{tpu_custom_call.1} parent=1 // pred_fallthru
      _
    // Predicated region
    $region10: #{tpu_custom_call.1} parent=1 // pred_check
      _
    $region11: #{tpu_custom_call.1} parent=1 // pred_check_branch
      %15 = sbr.rel (0) target = $region13
    $region12: #{tpu_custom_call.1} parent=1 // pred_region
      _
    $region13: #{tpu_custom_call.1} parent=1 // pred_fallthru
      _
    // Predicated region
    $region14: #{tpu_custom_call.1} parent=1 // pred_check
      _
    $region15: #{tpu_custom_call.1} parent=1 // pred_check_branch
      %17 = sbr.rel (0) target = $region17
    $region16: #{tpu_custom_call.1} parent=1 // pred_region
      _
    $region17: #{tpu_custom_call.1} parent=1 // pred_fallthru
      _
    %v18 = vlaneseq
    %v19 = vand.u32 %v18, 127
    %v20 = vld [vmem:[%s0] sm:$0xff]
    %v21 = vld [vmem:[%s0 + $0x8] sm:$0xff]
    %22 = vset.pattern.permute.xlu0 0
    %23 = vperm.xlu0 %22, %v20
    %v24 = vpop.permute.xlu0 %23
    %25 = vset.pattern.permute.xlu0 0
    %26 = vperm.xlu0 %25, %v21
    %v27 = vpop.permute.xlu0 %26
    %vm28 = vcmp.eq.s32.totalorder %v19, %v24
    %vm29 = vcmp.eq.s32.totalorder %v19, %v27
    %v30 = vld [vmem:[%s1] sm:$0xff]
    %v31 = vld [vmem:[%s1 + $0x8] sm:$0xff]
    %v32 = vadd.s32 %v30, 21
    %v33 = vadd.s32 %v31, 21
    %34 = vset.pattern.permute.xlu0 0
    %35 = vperm.xlu0 %34, %v32
    %v36 = vpop.permute.xlu0 %35
    %37 = vset.pattern.permute.xlu0 0
    %38 = vperm.xlu0 %37, %v33
    %v39 = vpop.permute.xlu0 %38
    %vm40 = vcmp.eq.s32.totalorder %v19, %v36
    %vm41 = vcmp.eq.s32.totalorder %v19, %v39
    %vm42 = vmor %vm28, %vm40
    %vm43 = vmor %vm29, %vm41
    %v44 = vsel %vm42, 1.0, 0.0
    %v45 = vsel %vm43, 1.0, 0.0
    %v46 = vld [vmem:[%s2] sm:$0xff]
    %v47 = vld [vmem:[%s2 + $0x8] sm:$0xff]
    %v48 = vld [vmem:[%s2 + $0x10] sm:$0xff]
    %v49 = vld [vmem:[%s2 + $0x18] sm:$0xff]
    %v50 = vld [vmem:[%s2 + $0x20] sm:$0xff]
    %v51 = vld [vmem:[%s2 + $0x28] sm:$0xff]
    %v52 = vld [vmem:[%s2 + $0x30] sm:$0xff]
    %v53 = vld [vmem:[%s2 + $0x38] sm:$0xff]
    %v54 = vld [vmem:[%s2 + $0x40] sm:$0xff]
    %v55 = vld [vmem:[%s2 + $0x48] sm:$0xff]
    %v56 = vld [vmem:[%s2 + $0x50] sm:$0xff]
    %v57 = vld [vmem:[%s2 + $0x58] sm:$0xff]
    %v58 = vld [vmem:[%s2 + $0x60] sm:$0xff]
    %v59 = vld [vmem:[%s2 + $0x68] sm:$0xff]
    %v60 = vld [vmem:[%s2 + $0x70] sm:$0xff]
    %v61 = vld [vmem:[%s2 + $0x78] sm:$0xff]
    %62 = vmatpush.msra.mxu0 %v61
    %63 = vmatpush.msra.mxu0 %v60
    %64 = vmatpush.msra.mxu0 %v59
    %65 = vmatpush.msra.mxu0 %v58
    %66 = vmatpush.msra.mxu0 %v57
    %67 = vmatpush.msra.mxu0 %v56
    %68 = vmatpush.msra.mxu0 %v55
    %69 = vmatpush.msra.mxu0 %v54
    %70 = vmatpush.msra.mxu0 %v53
    %71 = vmatpush.msra.mxu0 %v52
    %72 = vmatpush.msra.mxu0 %v51
    %73 = vmatpush.msra.mxu0 %v50
    %74 = vmatpush.msra.mxu0 %v49
    %75 = vmatpush.msra.mxu0 %v48
    %76 = vmatpush.msra.mxu0 %v47
    %77 = vmatpush.msra.mxu0 %v46
    %78 = vmatmul.f32.gmra.mxu0 %v44
    %v79 = vpop.f32.mrf.mxu0
    %v80 = vadd.f32 0.0, %v79
    %81 = vmatmul.f32.gmra.mxu0 %v45
    %v82 = vpop.f32.mrf.mxu0
    %v83 = vadd.f32 0.0, %v82
    %84 = vdwg.mxu0
    %v85 = vld [vmem:[%s3] sm:$0xff]
    %v86 = vld [vmem:[%s3 + $0x8] sm:$0xff]
    %v87 = vld [vmem:[%s3 + $0x10] sm:$0xff]
    %v88 = vld [vmem:[%s3 + $0x18] sm:$0xff]
    %v89 = vld [vmem:[%s3 + $0x20] sm:$0xff]
    %v90 = vld [vmem:[%s3 + $0x28] sm:$0xff]
    %v91 = vld [vmem:[%s3 + $0x30] sm:$0xff]
    %v92 = vld [vmem:[%s3 + $0x38] sm:$0xff]
    %v93 = vld [vmem:[%s3 + $0x40] sm:$0xff]
    %v94 = vld [vmem:[%s3 + $0x48] sm:$0xff]
    %v95 = vld [vmem:[%s3 + $0x50] sm:$0xff]
    %v96 = vld [vmem:[%s3 + $0x58] sm:$0xff]
    %v97 = vld [vmem:[%s3 + $0x60] sm:$0xff]
    %v98 = vld [vmem:[%s3 + $0x68] sm:$0xff]
    %v99 = vld [vmem:[%s3 + $0x70] sm:$0xff]
    %v100 = vld [vmem:[%s3 + $0x78] sm:$0xff]
    %101 = vmatpush.msra.mxu0 %v100
    %102 = vmatpush.msra.mxu0 %v99
    %103 = vmatpush.msra.mxu0 %v98
    %104 = vmatpush.msra.mxu0 %v97
    %105 = vmatpush.msra.mxu0 %v96
    %106 = vmatpush.msra.mxu0 %v95
    %107 = vmatpush.msra.mxu0 %v94
    %108 = vmatpush.msra.mxu0 %v93
    %109 = vmatpush.msra.mxu0 %v92
    %110 = vmatpush.msra.mxu0 %v91
    %111 = vmatpush.msra.mxu0 %v90
    %112 = vmatpush.msra.mxu0 %v89
    %113 = vmatpush.msra.mxu0 %v88
    %114 = vmatpush.msra.mxu0 %v87
    %115 = vmatpush.msra.mxu0 %v86
    %116 = vmatpush.msra.mxu0 %v85
    %117 = vmatmul.f32.gmra.mxu0 %v44
    %v118 = vpop.f32.mrf.mxu0
    %v119 = vadd.f32 0.0, %v118
    %120 = vmatmul.f32.gmra.mxu0 %v45
    %v121 = vpop.f32.mrf.mxu0
    %v122 = vadd.f32 0.0, %v121
    %123 = vdwg.mxu0
    %v124 = vmul.f32 %v80, %v119
    %v125 = vmul.f32 %v83, %v122
    %vm126 = vcmask 261120
    %127 = vst.msk [vmem:[#allocation2] sm:$0xff] %vm126, %v124
    %128 = vst.msk [vmem:[#allocation2 + $0x8] sm:$0xff] %vm126, %v125
    // Predicated region
    $region18: #{tpu_custom_call.1} parent=1 // pred_check
      _
    $region19: #{tpu_custom_call.1} parent=1 // pred_check_branch
      %130 = sbr.rel (0) target = $region21
    $region20: #{tpu_custom_call.1} parent=1 // pred_region
      %132 = vsyncadd [#allocation3], 0
      %s133 = sshll.u32 [#allocation2], 4
      %s134 = int_to_ptr.vmem [resolvable:$true] %s133
      %s135 = sshll.u32 %s4, 4
      %s136 = int_to_ptr.hbm [resolvable:$true] %s135
      %141 = dma.vmem_to_hbm [thread:$0]  %s134, 256, %s136, [#allocation3], 128, 128, 8
    $region21: #{tpu_custom_call.1} parent=1 // pred_fallthru
      _
    // Predicated region
    $region22: #{tpu_custom_call.1} parent=1 // pred_check
      _
    $region23: #{tpu_custom_call.1} parent=1 // pred_check_branch
      %143 = sbr.rel (0) target = $region25
    $region24: #{tpu_custom_call.1} parent=1 // pred_region
      %145 = dma.done [#allocation3], 256
    $region25: #{tpu_custom_call.1} parent=1 // pred_fallthru
      _
    %146 = vsyncpa [#allocation3], 1

</llo_original>
